<compile_context>
chip_gen: v6e
topology: v6e:2x2x1
jax: 0.10.0
libtpu: 0.0.40
codegen_flags: <defaults>
</compile_context>

<pallas_src>
import jax
import jax.numpy as jnp
from jax.experimental import pallas as pl
from jax.experimental.pallas import tpu as pltpu


# ----------------------------- helpers ------------------------------------ #

def _round_up(v, m):
    return ((v + m - 1) // m) * m


def _cost_estimate(x, weight):
    itemsize = jnp.dtype(x.dtype).itemsize
    return pl.CostEstimate(
        flops=3 * x.size,                     # mul, mul, add per element
        transcendentals=x.size,               # one tanh per element
        bytes_accessed=2 * x.size * itemsize  # x in + y out
        + 2 * weight.size * jnp.dtype(weight.dtype).itemsize,
    )


# ----------------------------- kernels ------------------------------------ #

def _dyt_channels_last_kernel(alpha_ref, x_ref, w_ref, b_ref, o_ref):
    # x_ref: (TILE_R, LANES), w_ref/b_ref: (1, LANES), alpha_ref: (1,) in SMEM
    a = alpha_ref[0].astype(x_ref.dtype)
    t = jnp.tanh(a * x_ref[...])
    o_ref[...] = (t * w_ref[...] + b_ref[...]).astype(o_ref.dtype)


def _dyt_channels_first_kernel(alpha_ref, x_ref, w_ref, b_ref, o_ref):
    # x_ref: (C, TILE_HW), w_ref/b_ref: (C, 1), alpha_ref: (1,) in SMEM
    a = alpha_ref[0].astype(x_ref.dtype)
    t = jnp.tanh(a * x_ref[...])
    # (C, 1) lane-broadcasts against (C, TILE_HW)
    o_ref[...] = (t * w_ref[...] + b_ref[...]).astype(o_ref.dtype)


# ----------------------------- wrapper ------------------------------------ #

def dyt_forward(x, alpha, weight, bias, channels_last):
    """DyT forward. alpha: (1,), weight/bias: (C,)."""
    alpha = alpha.astype(jnp.float32)
    weight = weight.astype(x.dtype)
    bias = bias.astype(x.dtype)
    itemsize = jnp.dtype(x.dtype).itemsize
    cost = _cost_estimate(x, weight)
    cparams_kwargs = dict(vmem_limit_bytes=32 * 1024 * 1024)

    if channels_last:
        # ---- x: (N, C) ----
        N, C = x.shape

        # Pack G rows into the lane dim so the output last dim is lane-dense
        # (a large multiple of 128) instead of masked partial stores.
        G = 1
        if C < 128 and 128 % C == 0:
            G = max(1, 512 // C)            # e.g. C=32 -> G=16 -> 512 lanes

        N_pad = _round_up(N, G)
        x_p = x if N_pad == N else jnp.pad(x, ((0, N_pad - N), (0, 0)))
        rows = N_pad // G
        lanes = G * C

        x2 = x_p.reshape(rows, lanes)
        w2 = jnp.tile(weight, G).reshape(1, lanes)
        b2 = jnp.tile(bias, G).reshape(1, lanes)

        # Row tile: multiple of 8, sized so x-in tile ~2 MiB (double-buffered
        # in + out stays well inside the scoped VMEM budget on all chips).
        if rows >= 8:
            target_rows = max(8, (2 * 1024 * 1024) // max(1, lanes * itemsize))
            tile_r = min(rows, target_rows)
            tile_r = max(8, (tile_r // 8) * 8)
        else:
            tile_r = rows                   # equals full dim -> always legal
        grid_r = pl.cdiv(rows, tile_r)

        out2 = pl.pallas_call(
            _dyt_channels_last_kernel,
            out_shape=jax.ShapeDtypeStruct((rows, lanes), x.dtype),
            grid=(grid_r,),
            in_specs=[
                pl.BlockSpec(memory_space=pltpu.SMEM),               # alpha
                pl.BlockSpec((tile_r, lanes), lambda i: (i, 0)),     # x
                pl.BlockSpec((1, lanes), lambda i: (0, 0)),          # weight
                pl.BlockSpec((1, lanes), lambda i: (0, 0)),          # bias
            ],
            out_specs=pl.BlockSpec((tile_r, lanes), lambda i: (i, 0)),
            compiler_params=pltpu.CompilerParams(
                dimension_semantics=("parallel",), **cparams_kwargs),
            cost_estimate=cost,
        )(alpha, x2, w2, b2)

        return out2.reshape(N_pad, C)[:N]

    # ---- channels_first: x is NCHW ----
    N, C, H, W = x.shape
    HW = H * W
    x3 = x.reshape(N, C, HW)
    w2 = weight.reshape(C, 1)
    b2 = bias.reshape(C, 1)

    # HW tile: lane-dense multiple of 128 sized so C * TILE_HW ~2 MiB.
    if HW <= 128:
        tile_hw = HW                        # equals full dim -> always legal
    else:
        target = max(128, (2 * 1024 * 1024) // max(1, C * itemsize))
        tile_hw = max(128, min((target // 128) * 128, 4096))
        tile_hw = min(tile_hw, _round_up(HW, 128))
    grid = (N, pl.cdiv(HW, tile_hw))

    out = pl.pallas_call(
        _dyt_channels_first_kernel,
        out_shape=jax.ShapeDtypeStruct((N, C, HW), x.dtype),
        grid=grid,
        in_specs=[
            pl.BlockSpec(memory_space=pltpu.SMEM),                       # alpha
            pl.BlockSpec((pl.Squeezed(), C, tile_hw),
                         lambda n, h: (n, 0, h)),                        # x tile
            pl.BlockSpec((C, 1), lambda n, h: (0, 0)),                   # weight
            pl.BlockSpec((C, 1), lambda n, h: (0, 0)),                   # bias
        ],
        out_specs=pl.BlockSpec((pl.Squeezed(), C, tile_hw),
                               lambda n, h: (n, 0, h)),
        compiler_params=pltpu.CompilerParams(
            dimension_semantics=("parallel", "parallel"), **cparams_kwargs),
        cost_estimate=cost,
    )(alpha, x3, w2, b2)
    return out.reshape(N, C, H, W)


# ----------------------------- reference ----------------------------------- #

def dyt_reference(x, alpha, weight, bias, channels_last):
    t = jnp.tanh(alpha * x)
    if channels_last:
        return t * weight + bias
    return t * weight[:, None, None] + bias[:, None, None]


# ------------------------------- main -------------------------------------- #

if __name__ == "__main__":
    key = jax.random.PRNGKey(0)
    k1, k2 = jax.random.split(key)

    alpha_init_value = 0.5
    alpha = jnp.ones((1,), jnp.float32) * alpha_init_value

    # ---- channels_first case: x is (N, C, H, W) ----
    N, C, H, W = 2, 4, 16, 16
    x_cf = jax.random.normal(k1, (N, C, H, W), dtype=jnp.float32)
    weight_cf = jnp.linspace(0.5, 1.5, C, dtype=jnp.float32)
    bias_cf = jnp.linspace(-0.25, 0.25, C, dtype=jnp.float32)

    out_cf = dyt_forward(x_cf, alpha, weight_cf, bias_cf, channels_last=False)
    jax.block_until_ready(out_cf)
    ref_cf = dyt_reference(x_cf, alpha, weight_cf, bias_cf, channels_last=False)
    assert out_cf.shape == (N, C, H, W)
    assert jnp.allclose(out_cf, ref_cf, atol=1e-5, rtol=1e-5)

    # ---- channels_last case: x is (N, C) ----
    N2, C2 = 2, 32
    x_cl = jax.random.normal(k2, (N2, C2), dtype=jnp.float32)
    weight_cl = jnp.linspace(0.5, 1.5, C2, dtype=jnp.float32)
    bias_cl = jnp.linspace(-0.25, 0.25, C2, dtype=jnp.float32)

    out_cl = dyt_forward(x_cl, alpha, weight_cl, bias_cl, channels_last=True)
    jax.block_until_ready(out_cl)
    ref_cl = dyt_reference(x_cl, alpha, weight_cl, bias_cl, channels_last=True)
    assert out_cl.shape == (N2, C2)
    assert jnp.allclose(out_cl, ref_cl, atol=1e-5, rtol=1e-5)

    print("KERNEL_OK")
</pallas_src>

<mosaic_0001>
module attributes {stable_mosaic.version = 11 : i64} {
  func.func @_dyt_channels_first_kernel(%arg0: i32, %arg1: i32, %arg2: memref<1xf32, #tpu.memory_space<smem>>, %arg3: memref<1x4x256xf32, #tpu.memory_space<vmem>>, %arg4: memref<4x1xf32, #tpu.memory_space<vmem>>, %arg5: memref<4x1xf32, #tpu.memory_space<vmem>>, %arg6: memref<1x4x256xf32, #tpu.memory_space<vmem>>) attributes {dimension_semantics = [#tpu.dimension_semantics<parallel>, #tpu.dimension_semantics<parallel>], iteration_bounds = array<i64: 2, 1>, scalar_prefetch = 0 : i64, scratch_operands = 0 : i64, tpu.core_type = #tpu.core_type<tc>, window_params = [{transform_indices = @transform_0, window_bounds = array<i64: 1>}, {transform_indices = @transform_1, window_bounds = array<i64: 1, 4, 256>}, {pipeline_mode = #tpu.pipeline_mode<synchronous>, transform_indices = @transform_2, window_bounds = array<i64: 4, 1>}, {pipeline_mode = #tpu.pipeline_mode<synchronous>, transform_indices = @transform_3, window_bounds = array<i64: 4, 1>}, {transform_indices = @transform_4, window_bounds = array<i64: 1, 4, 256>}]} {
    %c0 = arith.constant 0 : index
    %0 = memref.load %arg2[%c0] : memref<1xf32, #tpu.memory_space<smem>>
    %c0_0 = arith.constant 0 : index
    %c0_1 = arith.constant 0 : index
    %c0_2 = arith.constant 0 : index
    %1 = vector.load %arg3[%c0_0, %c0_1, %c0_2] : memref<1x4x256xf32, #tpu.memory_space<vmem>>, vector<1x4x256xf32>
    %2 = vector.shape_cast %1 : vector<1x4x256xf32> to vector<4x256xf32>
    %3 = vector.broadcast %0 : f32 to vector<4x256xf32>
    %4 = arith.mulf %3, %2 : vector<4x256xf32>
    %5 = math.tanh %4 : vector<4x256xf32>
    %c0_3 = arith.constant 0 : index
    %c0_4 = arith.constant 0 : index
    %6 = vector.load %arg4[%c0_3, %c0_4] : memref<4x1xf32, #tpu.memory_space<vmem>>, vector<4x1xf32>
    %7 = vector.broadcast %6 : vector<4x1xf32> to vector<4x256xf32>
    %8 = arith.mulf %5, %7 : vector<4x256xf32>
    %c0_5 = arith.constant 0 : index
    %c0_6 = arith.constant 0 : index
    %9 = vector.load %arg5[%c0_5, %c0_6] : memref<4x1xf32, #tpu.memory_space<vmem>>, vector<4x1xf32>
    %10 = vector.broadcast %9 : vector<4x1xf32> to vector<4x256xf32>
    %11 = arith.addf %8, %10 : vector<4x256xf32>
    %c0_7 = arith.constant 0 : index
    %c0_8 = arith.constant 0 : index
    %c0_9 = arith.constant 0 : index
    %12 = vector.load %arg6[%c0_7, %c0_8, %c0_9] : memref<1x4x256xf32, #tpu.memory_space<vmem>>, vector<1x4x256xf32>
    %13 = vector.shape_cast %12 : vector<1x4x256xf32> to vector<4x256xf32>
    %14 = vector.shape_cast %11 : vector<4x256xf32> to vector<1x4x256xf32>
    tpu.vector_store %arg6[%c0_7, %c0_8, %c0_9], %14 {strides = array<i32>} : memref<1x4x256xf32, #tpu.memory_space<vmem>>, vector<1x4x256xf32>,
    return
  }
  func.func @transform_0(%arg0: i32, %arg1: i32) -> i32 {
    %c0_i32 = arith.constant 0 : i32
    %c0_i32_0 = arith.constant 0 : i32
    return %c0_i32 : i32
  }
  func.func @transform_1(%arg0: i32, %arg1: i32) -> (i32, i32, i32) {
    %c0_i32 = arith.constant 0 : i32
    %c0_i32_0 = arith.constant 0 : i32
    return %arg0, %c0_i32, %arg1 : i32, i32, i32
  }
  func.func @transform_2(%arg0: i32, %arg1: i32) -> (i32, i32) {
    %c0_i32 = arith.constant 0 : i32
    %c0_i32_0 = arith.constant 0 : i32
    %c0_i32_1 = arith.constant 0 : i32
    return %c0_i32, %c0_i32_0 : i32, i32
  }
  func.func @transform_3(%arg0: i32, %arg1: i32) -> (i32, i32) {
    %c0_i32 = arith.constant 0 : i32
    %c0_i32_0 = arith.constant 0 : i32
    %c0_i32_1 = arith.constant 0 : i32
    return %c0_i32, %c0_i32_0 : i32, i32
  }
  func.func @transform_4(%arg0: i32, %arg1: i32) -> (i32, i32, i32) {
    %c0_i32 = arith.constant 0 : i32
    %c0_i32_0 = arith.constant 0 : i32
    return %arg0, %c0_i32, %arg1 : i32, i32, i32
  }
}

</mosaic_0001>

<llo_original>
// kernel: tpu_custom_call.1
$region0: #{tpu_custom_call.1}
  #allocation0 [shape = 'u32[]', space=smem, size = 0x4, offset = 0x4, fixed_abs, tag = 'smem constant byte address 0x4 - core index']
  #allocation1 [shape = 'u32[144,128]{1,0:T(1,128)}', space=vmem, size = 0x12000, scoped, tag = 'internal scratch']
  #allocation2 [shape = 'f32[1]{0:T(128)S(6)}', space=smem, size = 0x200, scoped, tag = 'scoped memory for tpu_custom_call.1']
  %s0 = inlined_call_operand.<no memory space> [shape: f32[1], index: 0, kind: input, shape index: {}]
  %s1 = inlined_call_operand.hbm [shape: f32[2,4,256], index: 1, kind: input, shape index: {}]
  %s2 = inlined_call_operand.vmem [shape: f32[4,1], index: 2, kind: input, shape index: {}]
  %s3 = inlined_call_operand.vmem [shape: f32[4,1], index: 3, kind: input, shape index: {}]
  %s4 = inlined_call_operand.hbm [shape: f32[2,4,256], index: 4, kind: output, shape index: {}]
  %s5 = sld [smem:[#allocation0]]
  $region53: #{tpu_custom_call.1} parent=0
    _
  %s7 = ssub.s32 1, %s5
  %s8 = scalar_select 0, %s7, %s5
  %9 = sst [smem:[#allocation2]] %s0
  $region1: #{tpu_custom_call.1} parent=0
    #allocation3 [shape = 'u8[8192]{0}', space=vmem, size = 0x2000, scoped, tag = 'input window, operand 1']
    #allocation4 [shape = 's32[2]{0}', space=sflag, size = 0x8, scoped, tag = 'scoped memory for tpu_custom_call.1']
    #allocation5 [shape = 's32[2]{0}', space=sflag, size = 0x8, scoped, tag = 'scoped memory for tpu_custom_call.1']
    #allocation6 [shape = 'u8[8192]{0}', space=vmem, size = 0x2000, scoped, tag = 'output window, operand 0']
    %10 = vsyncpa [#allocation4], 0
    %s11 = scalar_lea.sflag [#allocation4], 1
    %12 = vsyncpa %s11, 0
    %13 = vsyncpa [#allocation5], 0
    %s14 = scalar_lea.sflag [#allocation5], 1
    %15 = vsyncpa %s14, 0
    loop: start=0, step=1, limit=4
    $region2: #{tpu_custom_call.1} parent=1 // loop_pre_header
      _
    $region3: #{tpu_custom_call.1} parent=1 // loop_header
      %s17 = sphi 0, %s21
      %p18 = scmp.ge.s32.totalorder %s17, 4
      %s24 = sphi 0, %s36
      %s25 = sphi 0, %s32
      %s26 = sphi 0, %s24
      %s27 = sphi 0, %s25
      %s28 = sphi 0, %s26
      %s29 = sphi 0, %s27
      %s37 = sphi 0, %s37
      %s39 = sphi 0, %s37
      %s40 = sphi 0, %s39
      %s54 = sphi 0, %s40
      %s62 = sphi 0, %s64
      %s65 = sphi 0, %s62
      %s66 = sphi 0, %s65
      %s82 = sphi 0, %s66
      %s86 = sphi 0, %s86
      %s88 = sphi 0, %s86
      %s89 = sphi 0, %s88
      %s103 = sphi 0, %s89
      %s107 = sphi 0, %s107
      %s109 = sphi 0, %s107
      %s110 = sphi 0, %s109
      %s124 = sphi 0, %s110
      %s132 = sphi 0, %s134
      %s135 = sphi 0, %s132
      %s136 = sphi 0, %s135
      %s152 = sphi 0, %s136
    $region4: #{tpu_custom_call.1} parent=1 // loop_header_branch
      %20 = sbr.rel (%p18) target = $region8
    $region5: #{tpu_custom_call.1} parent=1 // loop_body
      %s22 = ssub.s32 %s17, 1
      %s23 = ssub.s32 %s17, 2
      %s30 = sadd.s32 1, %s25
      %p31 = scmp.ge.s32.totalorder %s30, 1
      %s32 = scalar_select %p31, 0, %s30
      %s33 = sadd.s32 1, %s24
      %s34 = scalar_select %p31, %s33, %s24
      %p35 = scmp.ge.s32.totalorder %s34, 2
      %s36 = scalar_select %p35, 0, %s34
      %s38 = sadd.s32 %s37, 1
      %p41 = scmp.eq.s32.totalorder %s17, 1
      %p42 = scmp.ne.s32.totalorder %s37, %s39
      %p43 = scmp.eq.s32.totalorder %s17, 0
      %p44 = por %p42, %p43
      %p45 = scmp.ne.s32.totalorder %s37, %s39
      %p46 = scmp.eq.s32.totalorder %s22, 1
      %p47 = por %p45, %p46
      %p48 = scmp.ne.s32.totalorder %s39, %s40
      %p49 = scmp.eq.s32.totalorder %s22, 0
      %p50 = por %p48, %p49
      %p51 = scmp.ne.s32.totalorder %s39, %s40
      %p52 = scmp.eq.s32.totalorder %s23, 1
      %p53 = por %p51, %p52
      %p55 = scmp.ne.s32.totalorder %s40, %s54
      %p56 = scmp.eq.s32.totalorder %s23, 0
      %p57 = por %p55, %p56
      %s58 = ssub.s32 %s24, %s36
      %s59 = ssub.s32 %s25, %s32
      %s60 = sor.u32 %s58, %s59
      %p61 = scmp.eq.s32.totalorder %s60, 0
      %s63 = sadd.s32 %s62, 1
      %s64 = scalar_select %p61, %s62, %s63
      %p67 = pneg %p61
      %p68 = scmp.eq.s32.totalorder %s17, 1
      %p69 = por %p67, %p68
      %p70 = scmp.ne.s32.totalorder %s62, %s65
      %p71 = scmp.eq.s32.totalorder %s17, 0
      %p72 = por %p70, %p71
      %p73 = scmp.ne.s32.totalorder %s62, %s65
      %p74 = scmp.eq.s32.totalorder %s22, 1
      %p75 = por %p73, %p74
      %p76 = scmp.ne.s32.totalorder %s65, %s66
      %p77 = scmp.eq.s32.totalorder %s22, 0
      %p78 = por %p76, %p77
      %p79 = scmp.ne.s32.totalorder %s65, %s66
      %p80 = scmp.eq.s32.totalorder %s23, 1
      %p81 = por %p79, %p80
      %p83 = scmp.ne.s32.totalorder %s66, %s82
      %p84 = scmp.eq.s32.totalorder %s23, 0
      %p85 = por %p83, %p84
      %s87 = sadd.s32 %s86, 1
      %p90 = scmp.eq.s32.totalorder %s17, 1
      %p91 = scmp.ne.s32.totalorder %s86, %s88
      %p92 = scmp.eq.s32.totalorder %s17, 0
      %p93 = por %p91, %p92
      %p94 = scmp.ne.s32.totalorder %s86, %s88
      %p95 = scmp.eq.s32.totalorder %s22, 1
      %p96 = por %p94, %p95
      %p97 = scmp.ne.s32.totalorder %s88, %s89
      %p98 = scmp.eq.s32.totalorder %s22, 0
      %p99 = por %p97, %p98
      %p100 = scmp.ne.s32.totalorder %s88, %s89
      %p101 = scmp.eq.s32.totalorder %s23, 1
      %p102 = por %p100, %p101
      %p104 = scmp.ne.s32.totalorder %s89, %s103
      %p105 = scmp.eq.s32.totalorder %s23, 0
      %p106 = por %p104, %p105
      %s108 = sadd.s32 %s107, 1
      %p111 = scmp.eq.s32.totalorder %s17, 1
      %p112 = scmp.ne.s32.totalorder %s107, %s109
      %p113 = scmp.eq.s32.totalorder %s17, 0
      %p114 = por %p112, %p113
      %p115 = scmp.ne.s32.totalorder %s107, %s109
      %p116 = scmp.eq.s32.totalorder %s22, 1
      %p117 = por %p115, %p116
      %p118 = scmp.ne.s32.totalorder %s109, %s110
      %p119 = scmp.eq.s32.totalorder %s22, 0
      %p120 = por %p118, %p119
      %p121 = scmp.ne.s32.totalorder %s109, %s110
      %p122 = scmp.eq.s32.totalorder %s23, 1
      %p123 = por %p121, %p122
      %p125 = scmp.ne.s32.totalorder %s110, %s124
      %p126 = scmp.eq.s32.totalorder %s23, 0
      %p127 = por %p125, %p126
      %s128 = ssub.s32 %s24, %s36
      %s129 = ssub.s32 %s25, %s32
      %s130 = sor.u32 %s128, %s129
      %p131 = scmp.eq.s32.totalorder %s130, 0
      %s133 = sadd.s32 %s132, 1
      %s134 = scalar_select %p131, %s132, %s133
      %p137 = pneg %p131
      %p138 = scmp.eq.s32.totalorder %s17, 1
      %p139 = por %p137, %p138
      %p140 = scmp.ne.s32.totalorder %s132, %s135
      %p141 = scmp.eq.s32.totalorder %s17, 0
      %p142 = por %p140, %p141
      %p143 = scmp.ne.s32.totalorder %s132, %s135
      %p144 = scmp.eq.s32.totalorder %s22, 1
      %p145 = por %p143, %p144
      %p146 = scmp.ne.s32.totalorder %s135, %s136
      %p147 = scmp.eq.s32.totalorder %s22, 0
      %p148 = por %p146, %p147
      %p149 = scmp.ne.s32.totalorder %s135, %s136
      %p150 = scmp.eq.s32.totalorder %s23, 1
      %p151 = por %p149, %p150
      %p153 = scmp.ne.s32.totalorder %s136, %s152
      %p154 = scmp.eq.s32.totalorder %s23, 0
      %p155 = por %p153, %p154
      %p156 = scmp.le.s32.totalorder 1, %s17
      %p157 = scmp.lt.s32.totalorder %s17, 3
      %p158 = pnand %p156, %p157
      %p159 = pneg %p158
      // Predicated region
      $region9: #{tpu_custom_call.1} parent=5 // pred_check
        _
      $region10: #{tpu_custom_call.1} parent=5 // pred_check_branch
        %161 = sbr.rel (%p158) target = $region12
      $region11: #{tpu_custom_call.1} parent=5 // pred_region
        %s162 = ssub.s32 %s17, 1
        // Predicated region
        $region13: #{tpu_custom_call.1} parent=11 // pred_check
          %p163 = pneg %p50
        $region14: #{tpu_custom_call.1} parent=11 // pred_check_branch
          %165 = sbr.rel (%p163) target = $region16
        $region15: #{tpu_custom_call.1} parent=11 // pred_region
          _
        $region16: #{tpu_custom_call.1} parent=11 // pred_fallthru
          _
        // Predicated region
        $region17: #{tpu_custom_call.1} parent=11 // pred_check
          %p166 = pneg %p99
        $region18: #{tpu_custom_call.1} parent=11 // pred_check_branch
          %168 = sbr.rel (%p166) target = $region20
        $region19: #{tpu_custom_call.1} parent=11 // pred_region
          _
        $region20: #{tpu_custom_call.1} parent=11 // pred_fallthru
          _
        // Predicated region
        $region21: #{tpu_custom_call.1} parent=11 // pred_check
          %p169 = pneg %p120
        $region22: #{tpu_custom_call.1} parent=11 // pred_check_branch
          %171 = sbr.rel (%p169) target = $region24
        $region23: #{tpu_custom_call.1} parent=11 // pred_region
          _
        $region24: #{tpu_custom_call.1} parent=11 // pred_fallthru
          _
      $region12: #{tpu_custom_call.1} parent=5 // pred_fallthru
        _
      %p172 = scmp.lt.s32.totalorder %s17, 2
      // Predicated region
      $region25: #{tpu_custom_call.1} parent=5 // pred_check
        %p173 = pneg %p172
      $region26: #{tpu_custom_call.1} parent=5 // pred_check_branch
        %175 = sbr.rel (%p173) target = $region28
      $region27: #{tpu_custom_call.1} parent=5 // pred_region
        // Predicated region
        $region29: #{tpu_custom_call.1} parent=27 // pred_check
          %p176 = pneg %p72
        $region30: #{tpu_custom_call.1} parent=27 // pred_check_branch
          %178 = sbr.rel (%p176) target = $region32
        $region31: #{tpu_custom_call.1} parent=27 // pred_region
          %s179 = sand.u32 %s62, 1
          %s180 = scalar_lea.sflag [#allocation4], %s179
          %s181 = sand.u32 %s62, 1
          %s182 = smul.addr %s181, 8
          %s183 = scalar_lea.vmem [#allocation3], %s182
          %s184 = smul.u32 2, %s25
          %s186 = ssub.s32 128, 128
          %187 = vsyncadd %s180, %s186
          %s188 = smul.addr %s24, 2
          %s189 = sadd.s32 %s184, %s188
          %s190 = smul.addr %s189, 64
          %s191 = scalar_lea.hbm %s1, %s190
          %s193 = sshll.u32 %s183, 4
          %s194 = int_to_ptr.vmem [resolvable:$true] %s193
          %196 = dma.hbm_to_vmem [thread:$0]  %s191, 128, %s194, %s180
        $region32: #{tpu_custom_call.1} parent=27 // pred_fallthru
          _
      $region28: #{tpu_custom_call.1} parent=5 // pred_fallthru
        _
      %p197 = scmp.le.s32.totalorder 1, %s17
      %p198 = scmp.lt.s32.totalorder %s17, 3
      %p199 = pnand %p197, %p198
      %p200 = pneg %p199
      // Predicated region
      $region33: #{tpu_custom_call.1} parent=5 // pred_check
        _
      $region34: #{tpu_custom_call.1} parent=5 // pred_check_branch
        %202 = sbr.rel (%p199) target = $region36
      $region35: #{tpu_custom_call.1} parent=5 // pred_region
        %s203 = ssub.s32 %s17, 1
        %s204 = sand.u32 %s65, 1
        %s205 = scalar_lea.sflag [#allocation4], %s204
        %s206 = sand.u32 %s65, 1
        %s207 = smul.addr %s206, 8
        %s208 = scalar_lea.vmem [#allocation3], %s207
        // Predicated region
        $region37: #{tpu_custom_call.1} parent=35 // pred_check
          %p209 = pneg %p78
        $region38: #{tpu_custom_call.1} parent=35 // pred_check_branch
          %211 = sbr.rel (%p209) target = $region40
        $region39: #{tpu_custom_call.1} parent=35 // pred_region
          %212 = dma.done %s205, 128
        $region40: #{tpu_custom_call.1} parent=35 // pred_fallthru
          _
        %p213 = pneg %p50
        %p214 = pneg %p47
        %s215 = sand.u32 %s65, 1
        %s216 = scalar_lea.sflag [#allocation4], %s215
        %s217 = sand.u32 %s65, 1
        %s218 = smul.addr %s217, 8
        %s219 = scalar_lea.vmem [#allocation3], %s218
        %p220 = pneg %p78
        %p221 = pneg %p75
        %p222 = pneg %p99
        %p223 = pneg %p96
        %p224 = pneg %p120
        %p225 = pneg %p117
        %p226 = pneg %p148
        %p227 = pneg %p145
        %s228 = sand.u32 %s135, 1
        %s229 = scalar_lea.sflag [#allocation5], %s228
        %s230 = sand.u32 %s135, 1
        %s231 = smul.addr %s230, 8
        %s232 = scalar_lea.vmem [#allocation6], %s231
        %s233 = smul.u32 2, %s27
        %s234 = smul.u32 2, %s27
        %s235 = sld [smem:[#allocation2]]
        %v236 = vld [vmem:[%s208] sm:$0xff]
        %v237 = vstv %s235
        %v238 = vmul.f32 %v237, %v236
        %v239 = vtanh.pop %v238
        %v240 = vld [vmem:[%s2] sm:$0xf]
        %242 = vset.pattern.permute.xlu0 0
        %243 = vperm.xlu0 %242, %v240
        %v244 = vpop.permute.xlu0 %243
        %v246 = vunpack.c.l.s4 839922192
        %v247 = vunpack.c.0.s8 %v246
        %v248 = vlaneseq
        %v249 = vshrl.u32 %v248, 7
        %v250 = vsub.s32 %v247, %v249
        %v251 = vrot.slane %v244, %v250
        %v253 = vmul.f32 %v239, %v251
        %v254 = vld [vmem:[%s3] sm:$0xf]
        %256 = vset.pattern.permute.xlu0 0
        %257 = vperm.xlu0 %256, %v254
        %v258 = vpop.permute.xlu0 %257
        %v260 = vunpack.c.l.s4 839922192
        %v261 = vunpack.c.0.s8 %v260
        %v262 = vlaneseq
        %v263 = vshrl.u32 %v262, 7
        %v264 = vsub.s32 %v261, %v263
        %v265 = vrot.slane %v258, %v264
        %v267 = vadd.f32 %v253, %v265
        %268 = vst [vmem:[%s232] sm:$0xff] %v267
        %s269 = sand.u32 %s135, 1
        %s270 = scalar_lea.sflag [#allocation5], %s269
        %s271 = sand.u32 %s135, 1
        %s272 = smul.addr %s271, 8
        %s273 = scalar_lea.vmem [#allocation6], %s272
        // Predicated region
        $region41: #{tpu_custom_call.1} parent=35 // pred_check
          %p274 = pneg %p145
        $region42: #{tpu_custom_call.1} parent=35 // pred_check_branch
          %276 = sbr.rel (%p274) target = $region44
        $region43: #{tpu_custom_call.1} parent=35 // pred_region
          %s277 = smul.u32 2, %s27
          %s279 = ssub.s32 128, 128
          %280 = vsyncadd %s270, %s279
          %s281 = smul.addr %s26, 2
          %s282 = sadd.s32 %s277, %s281
          %s283 = smul.addr %s282, 64
          %s284 = scalar_lea.hbm %s4, %s283
          %s286 = sshll.u32 %s273, 4
          %s287 = int_to_ptr.vmem [resolvable:$true] %s286
          %289 = dma.vmem_to_hbm [thread:$0]  %s287, 128, %s284, %s270
        $region44: #{tpu_custom_call.1} parent=35 // pred_fallthru
          _
      $region36: #{tpu_custom_call.1} parent=5 // pred_fallthru
        _
      %p290 = scmp.le.s32.totalorder 2, %s17
      // Predicated region
      $region45: #{tpu_custom_call.1} parent=5 // pred_check
        %p291 = pneg %p290
      $region46: #{tpu_custom_call.1} parent=5 // pred_check_branch
        %293 = sbr.rel (%p291) target = $region48
      $region47: #{tpu_custom_call.1} parent=5 // pred_region
        %s294 = ssub.s32 %s17, 2
        // Predicated region
        $region49: #{tpu_custom_call.1} parent=47 // pred_check
          %p295 = pneg %p151
        $region50: #{tpu_custom_call.1} parent=47 // pred_check_branch
          %297 = sbr.rel (%p295) target = $region52
        $region51: #{tpu_custom_call.1} parent=47 // pred_region
          %s298 = sand.u32 %s136, 1
          %s299 = scalar_lea.sflag [#allocation5], %s298
          %s300 = sand.u32 %s136, 1
          %s301 = smul.addr %s300, 8
          %s302 = scalar_lea.vmem [#allocation6], %s301
          %303 = dma.done %s299, 128
        $region52: #{tpu_custom_call.1} parent=47 // pred_fallthru
          _
      $region48: #{tpu_custom_call.1} parent=5 // pred_fallthru
        _
    $region6: #{tpu_custom_call.1} parent=1 // loop_footer
      %s21 = sadd.s32 1, %s17
    $region7: #{tpu_custom_call.1} parent=1 // loop_footer_branch
      %16 = sbr.rel target = $region3
    $region8: #{tpu_custom_call.1} parent=1 // loop_exit
      _
    %304 = vsyncpa [#allocation4], 1
    %s305 = scalar_lea.sflag [#allocation4], 1
    %306 = vsyncpa %s305, 1
    %307 = vsyncpa [#allocation5], 1
    %s308 = scalar_lea.sflag [#allocation5], 1
    %309 = vsyncpa %s308, 1

</llo_original>
